<compile_context>
chip_gen: v5e
topology: v5e:2x2
jax: 0.10.0
libtpu: 0.0.40
codegen_flags: <defaults>
</compile_context>

<pallas_src>
import jax
import jax.numpy as jnp
from jax.experimental import pallas as pl
from jax.experimental.pallas import tpu as pltpu

_LANE = 128


def _round_up(n, m):
    return (n + m - 1) // m * m


def _cdiv(a, b):
    return (a + b - 1) // b


def _predictor_kernel(a_ref,            # (1,  TB) amount, feature-major
                      o_ref,            # (Ko, TB) other,  feature-major
                      wa_ref, ba_ref,   # (8, 1) f32, (8, 1) f32   amount_branch Linear(1, 8)
                      wo_ref, bo_ref,   # (8, Ko) bf16, (8, 1) f32 other_branch  Linear(Ko, 8)
                      w1a_ref,          # (H, 8) bf16   combined_fc Linear(16, H), amount half
                      w1o_ref,          # (H, 8) bf16   combined_fc Linear(16, H), other  half
                      b1_ref,           # (H, 1) f32
                      w2_ref, b2_ref,   # (O, H) bf16, (O, 1) f32  combined_fc Linear(H, O)
                      out_ref):         # (O, TB) f32
    f32, bf16 = jnp.float32, jnp.bfloat16

    # amount_branch: Linear(1, 8) + ReLU  ==  outer product -> VPU broadcast mul.
    a = a_ref[...].astype(f32)                                          # (1, TB)
    h0a = jnp.maximum(wa_ref[...] * a + ba_ref[...], 0.0)               # (8, TB) f32

    # other_branch: Linear(Ko, 8) + ReLU on the MXU (bf16 operands, f32 acc).
    h0o = jnp.maximum(
        jnp.dot(wo_ref[...], o_ref[...].astype(bf16),
                preferred_element_type=f32)
        + bo_ref[...], 0.0)                                             # (8, TB) f32

    # combined_fc Linear(16, H) + ReLU, split along K to match the
    # torch.cat((out_amount, out_other), dim=1) ordering (no concat needed).
    h1 = jnp.maximum(
        jnp.dot(w1a_ref[...], h0a.astype(bf16), preferred_element_type=f32)
        + jnp.dot(w1o_ref[...], h0o.astype(bf16), preferred_element_type=f32)
        + b1_ref[...], 0.0)                                             # (H, TB) f32

    # combined_fc Linear(H, O)
    out_ref[...] = (
        jnp.dot(w2_ref[...], h1.astype(bf16), preferred_element_type=f32)
        + b2_ref[...]).astype(out_ref.dtype)                            # (O, TB)


def multi_branch_stock_predictor_fm(amount_fm, other_fm, params, *, block_b=32768):
    """Feature-major entry point.

    amount_fm: (1, B), other_fm: (other_input_size, B)  -> (output_size, B).
    Inputs may be f32 or bf16 (bf16 halves input HBM traffic); matmuls run with
    bf16 operands and f32 accumulation either way.
    """
    B = amount_fm.shape[1]
    in_o = other_fm.shape[0]
    hidden_size = params["w1"].shape[1]
    output_size = params["w2"].shape[1]
    f32, bf16 = jnp.float32, jnp.bfloat16

    # ---- host-side (one-time, tiny) weight prep: transposed, bf16 MXU operands ----
    wa_t = params["wa"].T.astype(f32)          # (8, 1)  stays f32 (VPU path)
    ba_t = params["ba"].T.astype(f32)          # (8, 1)
    wo_t = params["wo"].T.astype(bf16)         # (8, in_o)
    bo_t = params["bo"].T.astype(f32)          # (8, 1)
    w1_t = params["w1"].T                      # (H, 16)
    w1a = w1_t[:, :8].astype(bf16)             # (H, 8)  amount half of the concat
    w1o = w1_t[:, 8:].astype(bf16)             # (H, 8)  other  half of the concat
    b1_t = params["b1"].T.astype(f32)          # (H, 1)
    w2_t = params["w2"].T.astype(bf16)         # (O, H)
    b2_t = params["b2"].T.astype(f32)          # (O, 1)

    # ---- batch tiling: big tiles, no host-side padding (Pallas masks the ragged tail) ----
    b_lanes = _round_up(B, _LANE)
    tb = min(_round_up(block_b, _LANE), b_lanes)
    if tb == b_lanes and b_lanes >= 2 * _LANE:
        # Prefer >= 2 grid steps so the batch axis can shard across both
        # TensorCores on v7x (extra step costs ~0.35us; no-op on v5e/v6e).
        tb = _cdiv(b_lanes, 2 * _LANE) * _LANE
    num_blocks = _cdiv(B, tb)

    def batch_tile(rows):
        return pl.BlockSpec((rows, tb), lambda i: (0, i))

    def resident(shape):
        return pl.BlockSpec(shape, lambda i: (0, 0))

    in_specs = [
        batch_tile(1),                   # amount_fm
        batch_tile(in_o),                # other_fm
        resident(wa_t.shape), resident(ba_t.shape),
        resident(wo_t.shape), resident(bo_t.shape),
        resident(w1a.shape), resident(w1o.shape), resident(b1_t.shape),
        resident(w2_t.shape), resident(b2_t.shape),
    ]
    out_specs = batch_tile(output_size)

    flops = 2 * B * (1 * 8 + in_o * 8 + 16 * hidden_size + hidden_size * output_size)
    weight_bytes = int(
        wa_t.size * 4 + ba_t.size * 4 + wo_t.size * 2 + bo_t.size * 4
        + w1a.size * 2 + w1o.size * 2 + b1_t.size * 4 + w2_t.size * 2 + b2_t.size * 4)
    act_in_bytes = B * (amount_fm.dtype.itemsize * 1 + other_fm.dtype.itemsize * in_o)
    bytes_accessed = act_in_bytes + 4 * B * output_size + weight_bytes

    return pl.pallas_call(
        _predictor_kernel,
        out_shape=jax.ShapeDtypeStruct((output_size, B), jnp.float32),
        grid=(num_blocks,),
        in_specs=in_specs,
        out_specs=out_specs,
        compiler_params=pltpu.CompilerParams(
            dimension_semantics=("parallel",),
            # Covers the ~12 MB (TB=32768) .. ~25 MB (TB=65536) footprint; above
            # v5e's 16 MiB default, within every chip's physical VMEM.
            vmem_limit_bytes=32 * 1024 * 1024,
        ),
        cost_estimate=pl.CostEstimate(
            flops=flops, transcendentals=0, bytes_accessed=bytes_accessed),
    )(amount_fm, other_fm, wa_t, ba_t, wo_t, bo_t, w1a, w1o, b1_t, w2_t, b2_t)


def multi_branch_stock_predictor(amount, other, params, *, block_b=32768):
    """PyTorch-convention wrapper: amount (B,1), other (B,Ko) -> (B, output_size).

    The two input transposes and the output transpose are extra XLA passes; use
    multi_branch_stock_predictor_fm directly if the caller can supply/consume
    feature-major activations.
    """
    out_fm = multi_branch_stock_predictor_fm(amount.T, other.T, params,
                                             block_b=block_b)
    return out_fm.T


def init_params(key, other_input_size=6, hidden_size=32, output_size=4):
    """Deterministic synthetic parameters; weights are (in_features, out_features)."""
    ks = jax.random.split(key, 8)

    def lin(kw, kb, fan_in, fan_out):
        bound = 1.0 / jnp.sqrt(fan_in)
        w = jax.random.uniform(kw, (fan_in, fan_out), jnp.float32, -bound, bound)
        b = jax.random.uniform(kb, (1, fan_out), jnp.float32, -bound, bound)
        return w, b

    wa, ba = lin(ks[0], ks[1], 1, 8)                       # amount_branch Linear(1, 8)
    wo, bo = lin(ks[2], ks[3], other_input_size, 8)        # other_branch  Linear(Ko, 8)
    w1, b1 = lin(ks[4], ks[5], 16, hidden_size)            # combined_fc   Linear(16, H)
    w2, b2 = lin(ks[6], ks[7], hidden_size, output_size)   # combined_fc   Linear(H, O)
    return {"wa": wa, "ba": ba, "wo": wo, "bo": bo,
            "w1": w1, "b1": b1, "w2": w2, "b2": b2}


def reference_forward(amount, other, p):
    """Pure-JAX f32 reference mirroring the PyTorch forward."""
    out_amount = jnp.maximum(amount @ p["wa"] + p["ba"], 0.0)
    out_other = jnp.maximum(other @ p["wo"] + p["bo"], 0.0)
    combined = jnp.concatenate([out_amount, out_other], axis=1)
    hidden = jnp.maximum(combined @ p["w1"] + p["b1"], 0.0)
    return hidden @ p["w2"] + p["b2"]


def reference_forward_mixed(amount, other, p):
    """Reference with the same bf16-operand / f32-accumulate precision as the kernel."""
    f32, bf16 = jnp.float32, jnp.bfloat16
    out_amount = jnp.maximum(amount.astype(f32) @ p["wa"] + p["ba"], 0.0)
    out_other = jnp.maximum(
        jnp.dot(other.astype(bf16), p["wo"].astype(bf16),
                preferred_element_type=f32) + p["bo"], 0.0)
    w1 = p["w1"].astype(bf16)
    hidden = jnp.maximum(
        jnp.dot(out_amount.astype(bf16), w1[:8], preferred_element_type=f32)
        + jnp.dot(out_other.astype(bf16), w1[8:], preferred_element_type=f32)
        + p["b1"], 0.0)
    return jnp.dot(hidden.astype(bf16), p["w2"].astype(bf16),
                   preferred_element_type=f32) + p["b2"]


if __name__ == "__main__":
    key = jax.random.PRNGKey(0)
    k_params, k_amount, k_other = jax.random.split(key, 3)

    batch = 8
    other_input_size = 6

    params = init_params(k_params, other_input_size=other_input_size,
                         hidden_size=32, output_size=4)
    amount = jax.random.normal(k_amount, (batch, 1), jnp.float32)
    other = jax.random.normal(k_other, (batch, other_input_size), jnp.float32)

    out = multi_branch_stock_predictor(amount, other, params)
    out = jax.block_until_ready(out)
    assert out.shape == (batch, 4)

    # Tight check against a precision-matched (bf16 operand, f32 accum) reference.
    ref_mixed = reference_forward_mixed(amount, other, params)
    assert jnp.allclose(out, ref_mixed, atol=1e-3, rtol=1e-3), \
        "Pallas output mismatch vs precision-matched reference"

    # Looser check against the full-f32 PyTorch-equivalent reference
    # (tolerance loosened because matmul operands are bf16).
    ref_f32 = reference_forward(amount, other, params)
    assert jnp.allclose(out, ref_f32, atol=2e-2, rtol=2e-2), \
        "Pallas output mismatch vs f32 reference"

    print("KERNEL_OK")
</pallas_src>

<mosaic_0001>
module attributes {stable_mosaic.version = 11 : i64} {
  func.func @_predictor_kernel(%arg0: i32, %arg1: memref<1x128xf32, #tpu.memory_space<vmem>>, %arg2: memref<6x128xf32, #tpu.memory_space<vmem>>, %arg3: memref<8x1xf32, #tpu.memory_space<vmem>>, %arg4: memref<8x1xf32, #tpu.memory_space<vmem>>, %arg5: memref<8x6xbf16, #tpu.memory_space<vmem>>, %arg6: memref<8x1xf32, #tpu.memory_space<vmem>>, %arg7: memref<32x8xbf16, #tpu.memory_space<vmem>>, %arg8: memref<32x8xbf16, #tpu.memory_space<vmem>>, %arg9: memref<32x1xf32, #tpu.memory_space<vmem>>, %arg10: memref<4x32xbf16, #tpu.memory_space<vmem>>, %arg11: memref<4x1xf32, #tpu.memory_space<vmem>>, %arg12: memref<4x128xf32, #tpu.memory_space<vmem>>) attributes {dimension_semantics = [#tpu.dimension_semantics<parallel>], iteration_bounds = array<i64: 1>, scalar_prefetch = 0 : i64, scratch_operands = 0 : i64, tpu.core_type = #tpu.core_type<tc>, window_params = [{transform_indices = @transform_0, window_bounds = array<i64: 1, 128>}, {transform_indices = @transform_1, window_bounds = array<i64: 6, 128>}, {pipeline_mode = #tpu.pipeline_mode<synchronous>, transform_indices = @transform_2, window_bounds = array<i64: 8, 1>}, {pipeline_mode = #tpu.pipeline_mode<synchronous>, transform_indices = @transform_3, window_bounds = array<i64: 8, 1>}, {pipeline_mode = #tpu.pipeline_mode<synchronous>, transform_indices = @transform_4, window_bounds = array<i64: 8, 6>}, {pipeline_mode = #tpu.pipeline_mode<synchronous>, transform_indices = @transform_5, window_bounds = array<i64: 8, 1>}, {pipeline_mode = #tpu.pipeline_mode<synchronous>, transform_indices = @transform_6, window_bounds = array<i64: 32, 8>}, {pipeline_mode = #tpu.pipeline_mode<synchronous>, transform_indices = @transform_7, window_bounds = array<i64: 32, 8>}, {pipeline_mode = #tpu.pipeline_mode<synchronous>, transform_indices = @transform_8, window_bounds = array<i64: 32, 1>}, {pipeline_mode = #tpu.pipeline_mode<synchronous>, transform_indices = @transform_9, window_bounds = array<i64: 4, 32>}, {pipeline_mode = #tpu.pipeline_mode<synchronous>, transform_indices = @transform_10, window_bounds = array<i64: 4, 1>}, {transform_indices = @transform_11, window_bounds = array<i64: 4, 128>}]} {
    %c0 = arith.constant 0 : index
    %c0_0 = arith.constant 0 : index
    %0 = vector.load %arg1[%c0, %c0_0] : memref<1x128xf32, #tpu.memory_space<vmem>>, vector<1x128xf32>
    %c0_1 = arith.constant 0 : index
    %c0_2 = arith.constant 0 : index
    %1 = vector.load %arg3[%c0_1, %c0_2] : memref<8x1xf32, #tpu.memory_space<vmem>>, vector<8x1xf32>
    %2 = vector.broadcast %1 : vector<8x1xf32> to vector<8x128xf32>
    %3 = vector.broadcast %0 : vector<1x128xf32> to vector<8x128xf32>
    %4 = arith.mulf %2, %3 : vector<8x128xf32>
    %c0_3 = arith.constant 0 : index
    %c0_4 = arith.constant 0 : index
    %5 = vector.load %arg4[%c0_3, %c0_4] : memref<8x1xf32, #tpu.memory_space<vmem>>, vector<8x1xf32>
    %6 = vector.broadcast %5 : vector<8x1xf32> to vector<8x128xf32>
    %7 = arith.addf %4, %6 : vector<8x128xf32>
    %cst = arith.constant 0.000000e+00 : f32
    %8 = vector.broadcast %cst : f32 to vector<8x128xf32>
    %9 = arith.maximumf %7, %8 : vector<8x128xf32>
    %c0_5 = arith.constant 0 : index
    %c0_6 = arith.constant 0 : index
    %10 = vector.load %arg5[%c0_5, %c0_6] : memref<8x6xbf16, #tpu.memory_space<vmem>>, vector<8x6xbf16>
    %c0_7 = arith.constant 0 : index
    %c0_8 = arith.constant 0 : index
    %11 = vector.load %arg2[%c0_7, %c0_8] : memref<6x128xf32, #tpu.memory_space<vmem>>, vector<6x128xf32>
    %12 = arith.truncf %11 : vector<6x128xf32> to vector<6x128xbf16>
    %cst_9 = arith.constant dense<0.000000e+00> : vector<8x128xf32>
    %13 = tpu.matmul %10, %12, %cst_9 {dimension_numbers = #tpu.dot_dimension_numbers<[1], [0], [0], [1], [0, 0, 1, 1], [], []>} : vector<8x6xbf16>, vector<6x128xbf16>, vector<8x128xf32> -> vector<8x128xf32>
    %c0_10 = arith.constant 0 : index
    %c0_11 = arith.constant 0 : index
    %14 = vector.load %arg6[%c0_10, %c0_11] : memref<8x1xf32, #tpu.memory_space<vmem>>, vector<8x1xf32>
    %15 = vector.broadcast %14 : vector<8x1xf32> to vector<8x128xf32>
    %16 = arith.addf %13, %15 : vector<8x128xf32>
    %cst_12 = arith.constant 0.000000e+00 : f32
    %17 = vector.broadcast %cst_12 : f32 to vector<8x128xf32>
    %18 = arith.maximumf %16, %17 : vector<8x128xf32>
    %c0_13 = arith.constant 0 : index
    %c0_14 = arith.constant 0 : index
    %19 = vector.load %arg7[%c0_13, %c0_14] : memref<32x8xbf16, #tpu.memory_space<vmem>>, vector<32x8xbf16>
    %20 = arith.truncf %9 : vector<8x128xf32> to vector<8x128xbf16>
    %cst_15 = arith.constant dense<0.000000e+00> : vector<32x128xf32>
    %21 = tpu.matmul %19, %20, %cst_15 {dimension_numbers = #tpu.dot_dimension_numbers<[1], [0], [0], [1], [0, 0, 1, 1], [], []>} : vector<32x8xbf16>, vector<8x128xbf16>, vector<32x128xf32> -> vector<32x128xf32>
    %c0_16 = arith.constant 0 : index
    %c0_17 = arith.constant 0 : index
    %22 = vector.load %arg8[%c0_16, %c0_17] : memref<32x8xbf16, #tpu.memory_space<vmem>>, vector<32x8xbf16>
    %23 = arith.truncf %18 : vector<8x128xf32> to vector<8x128xbf16>
    %cst_18 = arith.constant dense<0.000000e+00> : vector<32x128xf32>
    %24 = tpu.matmul %22, %23, %cst_18 {dimension_numbers = #tpu.dot_dimension_numbers<[1], [0], [0], [1], [0, 0, 1, 1], [], []>} : vector<32x8xbf16>, vector<8x128xbf16>, vector<32x128xf32> -> vector<32x128xf32>
    %25 = arith.addf %21, %24 : vector<32x128xf32>
    %c0_19 = arith.constant 0 : index
    %c0_20 = arith.constant 0 : index
    %26 = vector.load %arg9[%c0_19, %c0_20] : memref<32x1xf32, #tpu.memory_space<vmem>>, vector<32x1xf32>
    %27 = vector.broadcast %26 : vector<32x1xf32> to vector<32x128xf32>
    %28 = arith.addf %25, %27 : vector<32x128xf32>
    %cst_21 = arith.constant 0.000000e+00 : f32
    %29 = vector.broadcast %cst_21 : f32 to vector<32x128xf32>
    %30 = arith.maximumf %28, %29 : vector<32x128xf32>
    %c0_22 = arith.constant 0 : index
    %c0_23 = arith.constant 0 : index
    %31 = vector.load %arg10[%c0_22, %c0_23] : memref<4x32xbf16, #tpu.memory_space<vmem>>, vector<4x32xbf16>
    %32 = arith.truncf %30 : vector<32x128xf32> to vector<32x128xbf16>
    %cst_24 = arith.constant dense<0.000000e+00> : vector<4x128xf32>
    %33 = tpu.matmul %31, %32, %cst_24 {dimension_numbers = #tpu.dot_dimension_numbers<[1], [0], [0], [1], [0, 0, 1, 1], [], []>} : vector<4x32xbf16>, vector<32x128xbf16>, vector<4x128xf32> -> vector<4x128xf32>
    %c0_25 = arith.constant 0 : index
    %c0_26 = arith.constant 0 : index
    %34 = vector.load %arg11[%c0_25, %c0_26] : memref<4x1xf32, #tpu.memory_space<vmem>>, vector<4x1xf32>
    %35 = vector.broadcast %34 : vector<4x1xf32> to vector<4x128xf32>
    %36 = arith.addf %33, %35 : vector<4x128xf32>
    %c0_27 = arith.constant 0 : index
    %c0_28 = arith.constant 0 : index
    %37 = vector.load %arg12[%c0_27, %c0_28] : memref<4x128xf32, #tpu.memory_space<vmem>>, vector<4x128xf32>
    tpu.vector_store %arg12[%c0_27, %c0_28], %36 {strides = array<i32>} : memref<4x128xf32, #tpu.memory_space<vmem>>, vector<4x128xf32>,
    return
  }
  func.func @transform_0(%arg0: i32) -> (i32, i32) {
    %c0_i32 = arith.constant 0 : i32
    %c0_i32_0 = arith.constant 0 : i32
    return %c0_i32, %arg0 : i32, i32
  }
  func.func @transform_1(%arg0: i32) -> (i32, i32) {
    %c0_i32 = arith.constant 0 : i32
    %c0_i32_0 = arith.constant 0 : i32
    return %c0_i32, %arg0 : i32, i32
  }
  func.func @transform_2(%arg0: i32) -> (i32, i32) {
    %c0_i32 = arith.constant 0 : i32
    %c0_i32_0 = arith.constant 0 : i32
    %c0_i32_1 = arith.constant 0 : i32
    return %c0_i32, %c0_i32_0 : i32, i32
  }
  func.func @transform_3(%arg0: i32) -> (i32, i32) {
    %c0_i32 = arith.constant 0 : i32
    %c0_i32_0 = arith.constant 0 : i32
    %c0_i32_1 = arith.constant 0 : i32
    return %c0_i32, %c0_i32_0 : i32, i32
  }
  func.func @transform_4(%arg0: i32) -> (i32, i32) {
    %c0_i32 = arith.constant 0 : i32
    %c0_i32_0 = arith.constant 0 : i32
    %c0_i32_1 = arith.constant 0 : i32
    return %c0_i32, %c0_i32_0 : i32, i32
  }
  func.func @transform_5(%arg0: i32) -> (i32, i32) {
    %c0_i32 = arith.constant 0 : i32
    %c0_i32_0 = arith.constant 0 : i32
    %c0_i32_1 = arith.constant 0 : i32
    return %c0_i32, %c0_i32_0 : i32, i32
  }
  func.func @transform_6(%arg0: i32) -> (i32, i32) {
    %c0_i32 = arith.constant 0 : i32
    %c0_i32_0 = arith.constant 0 : i32
    %c0_i32_1 = arith.constant 0 : i32
    return %c0_i32, %c0_i32_0 : i32, i32
  }
  func.func @transform_7(%arg0: i32) -> (i32, i32) {
    %c0_i32 = arith.constant 0 : i32
    %c0_i32_0 = arith.constant 0 : i32
    %c0_i32_1 = arith.constant 0 : i32
    return %c0_i32, %c0_i32_0 : i32, i32
  }
  func.func @transform_8(%arg0: i32) -> (i32, i32) {
    %c0_i32 = arith.constant 0 : i32
    %c0_i32_0 = arith.constant 0 : i32
    %c0_i32_1 = arith.constant 0 : i32
    return %c0_i32, %c0_i32_0 : i32, i32
  }
  func.func @transform_9(%arg0: i32) -> (i32, i32) {
    %c0_i32 = arith.constant 0 : i32
    %c0_i32_0 = arith.constant 0 : i32
    %c0_i32_1 = arith.constant 0 : i32
    return %c0_i32, %c0_i32_0 : i32, i32
  }
  func.func @transform_10(%arg0: i32) -> (i32, i32) {
    %c0_i32 = arith.constant 0 : i32
    %c0_i32_0 = arith.constant 0 : i32
    %c0_i32_1 = arith.constant 0 : i32
    return %c0_i32, %c0_i32_0 : i32, i32
  }
  func.func @transform_11(%arg0: i32) -> (i32, i32) {
    %c0_i32 = arith.constant 0 : i32
    %c0_i32_0 = arith.constant 0 : i32
    return %c0_i32, %arg0 : i32, i32
  }
}

</mosaic_0001>

<llo_original>
// kernel: tpu_custom_call.1
$region0: #{tpu_custom_call.1}
  #allocation0 [shape = 'u32[]', space=smem, size = 0x4, offset = 0x4, fixed_abs, tag = 'smem constant byte address 0x4 - core index']
  #allocation1 [shape = 'u32[72,128]{1,0:T(1,128)}', space=vmem, size = 0x9000, scoped, tag = 'internal scratch']
  %s0 = inlined_call_operand.vmem [shape: f32[1,8], index: 0, kind: input, shape index: {}]
  %s1 = inlined_call_operand.vmem [shape: f32[6,8], index: 1, kind: input, shape index: {}]
  %s2 = inlined_call_operand.vmem [shape: f32[8,1], index: 2, kind: input, shape index: {}]
  %s3 = inlined_call_operand.vmem [shape: f32[8,1], index: 3, kind: input, shape index: {}]
  %s4 = inlined_call_operand.vmem [shape: bf16[8,6], index: 4, kind: input, shape index: {}]
  %s5 = inlined_call_operand.vmem [shape: f32[8,1], index: 5, kind: input, shape index: {}]
  %s6 = inlined_call_operand.vmem [shape: bf16[32,8], index: 6, kind: input, shape index: {}]
  %s7 = inlined_call_operand.vmem [shape: bf16[32,8], index: 7, kind: input, shape index: {}]
  %s8 = inlined_call_operand.vmem [shape: f32[32,1], index: 8, kind: input, shape index: {}]
  %s9 = inlined_call_operand.vmem [shape: bf16[4,32], index: 9, kind: input, shape index: {}]
  %s10 = inlined_call_operand.vmem [shape: f32[4,1], index: 10, kind: input, shape index: {}]
  %s11 = inlined_call_operand.hbm [shape: f32[4,8], index: 11, kind: output, shape index: {}]
  %s12 = sld [smem:[#allocation0]]
  $region54: #{tpu_custom_call.1} parent=0
    _
  %s14 = ssub.s32 1, %s12
  %s15 = scalar_select 0, %s14, %s12
  $region1: #{tpu_custom_call.1} parent=0
    #allocation2 [shape = 'u8[2048]{0}', space=vmem, size = 0x800, scoped, tag = 'output window, operand 0, single buffered']
    #allocation3 [shape = 's32[1]{0}', space=sflag, size = 0x4, scoped, tag = 'scoped memory for tpu_custom_call.1']
    %16 = vsyncpa [#allocation3], 0
    // Predicated region
    $region2: #{tpu_custom_call.1} parent=1 // pred_check
      _
    $region3: #{tpu_custom_call.1} parent=1 // pred_check_branch
      %18 = sbr.rel (0) target = $region5
    $region4: #{tpu_custom_call.1} parent=1 // pred_region
      _
    $region5: #{tpu_custom_call.1} parent=1 // pred_fallthru
      _
    // Predicated region
    $region6: #{tpu_custom_call.1} parent=1 // pred_check
      _
    $region7: #{tpu_custom_call.1} parent=1 // pred_check_branch
      %20 = sbr.rel (0) target = $region9
    $region8: #{tpu_custom_call.1} parent=1 // pred_region
      _
    $region9: #{tpu_custom_call.1} parent=1 // pred_fallthru
      _
    // Predicated region
    $region10: #{tpu_custom_call.1} parent=1 // pred_check
      _
    $region11: #{tpu_custom_call.1} parent=1 // pred_check_branch
      %22 = sbr.rel (0) target = $region13
    $region12: #{tpu_custom_call.1} parent=1 // pred_region
      _
    $region13: #{tpu_custom_call.1} parent=1 // pred_fallthru
      _
    // Predicated region
    $region14: #{tpu_custom_call.1} parent=1 // pred_check
      _
    $region15: #{tpu_custom_call.1} parent=1 // pred_check_branch
      %24 = sbr.rel (0) target = $region17
    $region16: #{tpu_custom_call.1} parent=1 // pred_region
      _
    $region17: #{tpu_custom_call.1} parent=1 // pred_fallthru
      _
    // Predicated region
    $region18: #{tpu_custom_call.1} parent=1 // pred_check
      _
    $region19: #{tpu_custom_call.1} parent=1 // pred_check_branch
      %26 = sbr.rel (0) target = $region21
    $region20: #{tpu_custom_call.1} parent=1 // pred_region
      _
    $region21: #{tpu_custom_call.1} parent=1 // pred_fallthru
      _
    // Predicated region
    $region22: #{tpu_custom_call.1} parent=1 // pred_check
      _
    $region23: #{tpu_custom_call.1} parent=1 // pred_check_branch
      %28 = sbr.rel (0) target = $region25
    $region24: #{tpu_custom_call.1} parent=1 // pred_region
      _
    $region25: #{tpu_custom_call.1} parent=1 // pred_fallthru
      _
    // Predicated region
    $region26: #{tpu_custom_call.1} parent=1 // pred_check
      _
    $region27: #{tpu_custom_call.1} parent=1 // pred_check_branch
      %30 = sbr.rel (0) target = $region29
    $region28: #{tpu_custom_call.1} parent=1 // pred_region
      _
    $region29: #{tpu_custom_call.1} parent=1 // pred_fallthru
      _
    // Predicated region
    $region30: #{tpu_custom_call.1} parent=1 // pred_check
      _
    $region31: #{tpu_custom_call.1} parent=1 // pred_check_branch
      %32 = sbr.rel (0) target = $region33
    $region32: #{tpu_custom_call.1} parent=1 // pred_region
      _
    $region33: #{tpu_custom_call.1} parent=1 // pred_fallthru
      _
    // Predicated region
    $region34: #{tpu_custom_call.1} parent=1 // pred_check
      _
    $region35: #{tpu_custom_call.1} parent=1 // pred_check_branch
      %34 = sbr.rel (0) target = $region37
    $region36: #{tpu_custom_call.1} parent=1 // pred_region
      _
    $region37: #{tpu_custom_call.1} parent=1 // pred_fallthru
      _
    // Predicated region
    $region38: #{tpu_custom_call.1} parent=1 // pred_check
      _
    $region39: #{tpu_custom_call.1} parent=1 // pred_check_branch
      %36 = sbr.rel (0) target = $region41
    $region40: #{tpu_custom_call.1} parent=1 // pred_region
      _
    $region41: #{tpu_custom_call.1} parent=1 // pred_fallthru
      _
    // Predicated region
    $region42: #{tpu_custom_call.1} parent=1 // pred_check
      _
    $region43: #{tpu_custom_call.1} parent=1 // pred_check_branch
      %38 = sbr.rel (0) target = $region45
    $region44: #{tpu_custom_call.1} parent=1 // pred_region
      _
    $region45: #{tpu_custom_call.1} parent=1 // pred_fallthru
      _
    %v40 = vld [vmem:[%s0] sm:$0x1]
    %v41 = vld [vmem:[%s2] sm:$0xff]
    %43 = vset.pattern.permute.xlu0 0
    %44 = vperm.xlu0 %43, %v41
    %v45 = vpop.permute.xlu0 %44
    %v48 = vperm.slane %v40, 0
    %v50 = vmul.f32 %v45, %v48
    %v51 = vld [vmem:[%s3] sm:$0xff]
    %53 = vset.pattern.permute.xlu0 0
    %54 = vperm.xlu0 %53, %v51
    %v55 = vpop.permute.xlu0 %54
    %v57 = vadd.f32 %v50, %v55
    %v58 = vmax.f32 %v57, 0.0
    %v59 = vld [vmem:[%s4] sm:$0xf]
    %v60 = vld [vmem:[%s1] sm:$0x3f]
    %v61 = vpack.c.bf16 %v60, %v60
    %v62 = vld [vmem:[%s5] sm:$0xff]
    %64 = vset.pattern.permute.xlu0 0
    %65 = vperm.xlu0 %64, %v62
    %v66 = vpop.permute.xlu0 %65
    %vm68 = vcmask 48128
    %v70 = vsel %vm68, %v59, 0
    %vm72 = vcmask 1042432
    %v74 = vsel %vm72, %v61, 0
    %76 = vmatpush.bf16.msra.mxu0 0
    %77 = vmatpush.bf16.msra.mxu0 0
    %78 = vmatpush.bf16.msra.mxu0 0
    %79 = vmatpush.bf16.msra.mxu0 0
    %80 = vmatpush.bf16.msra.mxu0 0
    %81 = vmatpush.bf16.msra.mxu0 0
    %82 = vmatpush.bf16.msra.mxu0 0
    %83 = vmatpush.bf16.msra.mxu0 %v74
    %84 = vmatmul.bf16.gmra.mxu0 %v70
    %v85 = vpop.f32.mrf.mxu0
    %v86 = vadd.f32 %v66, %v85
    %v87 = vpop.f32.mrf.mxu0
    %88 = vdwg.mxu0
    %v89 = vmax.f32 %v86, 0.0
    %v90 = vld [vmem:[%s6] sm:$0xf]
    %v91 = vld [vmem:[%s6 + $0x4] sm:$0xf]
    %v92 = vld [vmem:[%s6 + $0x8] sm:$0xf]
    %v93 = vld [vmem:[%s6 + $0xc] sm:$0xf]
    %v94 = vpack.c.bf16 %v58, %v58
    %v95 = vld [vmem:[%s7] sm:$0xf]
    %v96 = vld [vmem:[%s7 + $0x4] sm:$0xf]
    %v97 = vld [vmem:[%s7 + $0x8] sm:$0xf]
    %v98 = vld [vmem:[%s7 + $0xc] sm:$0xf]
    %v99 = vpack.c.bf16 %v89, %v89
    %v104 = vunpack.c.l.b16 %v95
    %v105 = vunpack.c.l.b16 %v96
    %v106 = vunpack.c.l.b16 %v97
    %v107 = vunpack.c.l.b16 %v98
    %v108 = vpack.c.b16 %v105, %v104
    %v109 = vpack.c.b16 %v107, %v106
    %vm110 = vcmask 64512
    %v112 = vsel %vm110, %v108, 0
    %v115 = vsel %vm110, %v109, 0
    %vm117 = vcmask 1043456
    %v119 = vsel %vm117, %v99, 0
    %121 = vmatpush.bf16.msra.mxu0 0
    %122 = vmatpush.bf16.msra.mxu0 0
    %123 = vmatpush.bf16.msra.mxu0 0
    %124 = vmatpush.bf16.msra.mxu0 0
    %125 = vmatpush.bf16.msra.mxu0 0
    %126 = vmatpush.bf16.msra.mxu0 0
    %127 = vmatpush.bf16.msra.mxu0 0
    %128 = vmatpush.bf16.msra.mxu0 %v119
    %129 = vmatmul.bf16.gmra.mxu0 %v112
    %v130 = vpop.f32.mrf.mxu0
    %v131 = vadd.f32 0.0, %v130
    %v132 = vpop.f32.mrf.mxu0
    %v133 = vadd.f32 0.0, %v132
    %134 = vmatmul.bf16.gmra.mxu0 %v115
    %v135 = vpop.f32.mrf.mxu0
    %v136 = vadd.f32 0.0, %v135
    %v137 = vpop.f32.mrf.mxu0
    %v138 = vadd.f32 0.0, %v137
    %139 = vdwg.mxu0
    %v144 = vunpack.c.l.b16 %v90
    %v145 = vunpack.c.l.b16 %v91
    %v146 = vunpack.c.l.b16 %v92
    %v147 = vunpack.c.l.b16 %v93
    %v148 = vpack.c.b16 %v145, %v144
    %v149 = vpack.c.b16 %v147, %v146
    %v151 = vsel %vm110, %v148, 0
    %v154 = vsel %vm110, %v149, 0
    %v157 = vsel %vm117, %v94, 0
    %159 = vmatpush.bf16.msra.mxu0 0
    %160 = vmatpush.bf16.msra.mxu0 0
    %161 = vmatpush.bf16.msra.mxu0 0
    %162 = vmatpush.bf16.msra.mxu0 0
    %163 = vmatpush.bf16.msra.mxu0 0
    %164 = vmatpush.bf16.msra.mxu0 0
    %165 = vmatpush.bf16.msra.mxu0 0
    %166 = vmatpush.bf16.msra.mxu0 %v157
    %167 = vmatmul.bf16.gmra.mxu0 %v151
    %v168 = vpop.f32.mrf.mxu0
    %v169 = vadd.f32 %v131, %v168
    %v170 = vpop.f32.mrf.mxu0
    %v171 = vadd.f32 %v133, %v170
    %172 = vmatmul.bf16.gmra.mxu0 %v154
    %v173 = vpop.f32.mrf.mxu0
    %v174 = vadd.f32 %v136, %v173
    %v175 = vpop.f32.mrf.mxu0
    %v176 = vadd.f32 %v138, %v175
    %177 = vdwg.mxu0
    %v178 = vld [vmem:[%s8] sm:$0xff]
    %v179 = vld [vmem:[%s8 + $0x8] sm:$0xff]
    %v180 = vld [vmem:[%s8 + $0x10] sm:$0xff]
    %v181 = vld [vmem:[%s8 + $0x18] sm:$0xff]
    %183 = vset.pattern.permute.xlu0 0
    %184 = vperm.xlu0 %183, %v178
    %v185 = vpop.permute.xlu0 %184
    %188 = vset.pattern.permute.xlu0 0
    %189 = vperm.xlu0 %188, %v179
    %v190 = vpop.permute.xlu0 %189
    %193 = vset.pattern.permute.xlu0 0
    %194 = vperm.xlu0 %193, %v180
    %v195 = vpop.permute.xlu0 %194
    %198 = vset.pattern.permute.xlu0 0
    %199 = vperm.xlu0 %198, %v181
    %v200 = vpop.permute.xlu0 %199
    %v202 = vadd.f32 %v169, %v185
    %v203 = vadd.f32 %v171, %v190
    %v204 = vadd.f32 %v174, %v195
    %v205 = vadd.f32 %v176, %v200
    %v206 = vmax.f32 %v202, 0.0
    %v207 = vmax.f32 %v203, 0.0
    %v208 = vmax.f32 %v204, 0.0
    %v209 = vmax.f32 %v205, 0.0
    %v210 = vld [vmem:[%s9] sm:$0x3]
    %v211 = vpack.c.bf16 %v207, %v206
    %v212 = vpack.c.bf16 %v209, %v208
    %v213 = vld [vmem:[%s10] sm:$0xf]
    %215 = vset.pattern.permute.xlu0 0
    %216 = vperm.xlu0 %215, %v213
    %v217 = vpop.permute.xlu0 %216
    %vm219 = vcmask 261120
    %v221 = vsel %vm219, %v210, 0
    %223 = vmatpush.bf16.msra.mxu0 0
    %224 = vmatpush.bf16.msra.mxu0 0
    %225 = vmatpush.bf16.msra.mxu0 0
    %226 = vmatpush.bf16.msra.mxu0 0
    %227 = vmatpush.bf16.msra.mxu0 0
    %228 = vmatpush.bf16.msra.mxu0 0
    %229 = vmatpush.bf16.msra.mxu0 %v212
    %230 = vmatpush.bf16.msra.mxu0 %v211
    %231 = vmatmul.bf16.gmra.mxu0 %v221
    %v232 = vpop.f32.mrf.mxu0
    %v233 = vadd.f32 %v217, %v232
    %v234 = vpop.f32.mrf.mxu0
    %235 = vdwg.mxu0
    %236 = vst [vmem:[#allocation2] sm:$0xf] %v233
    // Predicated region
    $region46: #{tpu_custom_call.1} parent=1 // pred_check
      _
    $region47: #{tpu_custom_call.1} parent=1 // pred_check_branch
      %238 = sbr.rel (0) target = $region49
    $region48: #{tpu_custom_call.1} parent=1 // pred_region
      %240 = vsyncadd [#allocation3], 0
      %s242 = sshll.u32 [#allocation2], 4
      %s243 = int_to_ptr.vmem [resolvable:$true] %s242
      %s244 = sshll.u32 %s11, 4
      %s245 = int_to_ptr.hbm [resolvable:$true] %s244
      %247 = dma.vmem_to_hbm [thread:$0]  %s243, 64, %s245, [#allocation3]
    $region49: #{tpu_custom_call.1} parent=1 // pred_fallthru
      _
    // Predicated region
    $region50: #{tpu_custom_call.1} parent=1 // pred_check
      _
    $region51: #{tpu_custom_call.1} parent=1 // pred_check_branch
      %249 = sbr.rel (0) target = $region53
    $region52: #{tpu_custom_call.1} parent=1 // pred_region
      %251 = dma.done [#allocation3], 64
    $region53: #{tpu_custom_call.1} parent=1 // pred_fallthru
      _
    %252 = vsyncpa [#allocation3], 1

</llo_original>
